<compile_context>
chip_gen: v6e
topology: v6e:2x2x1
jax: 0.10.0
libtpu: 0.0.40
codegen_flags: <defaults>
</compile_context>

<pallas_src>
import jax
import jax.numpy as jnp
from jax.experimental import pallas as pl
from jax.experimental.pallas import tpu as pltpu

_MiB = 1024 * 1024


def _round_up(a, b):
    return ((a + b - 1) // b) * b


def _gelu_tanh(x):
    # GPT-2 style GELU (tanh approximation):
    # 0.5 * x * (1 + tanh(sqrt(2/pi) * (x + 0.044715 * x^3)))
    c = jnp.sqrt(jnp.asarray(2.0 / jnp.pi, dtype=x.dtype))
    return 0.5 * x * (1.0 + jnp.tanh(c * (x + 0.044715 * x * x * x)))


# ---------------------------------------------------------------------------
# Kernels
# ---------------------------------------------------------------------------
def _ff_kernel_acc(x_ref, w1_ref, b1_ref, w2_ref, b2_ref, o_ref, acc_ref):
    """Non-f32 output: accumulate in a separate f32 VMEM scratch, cast on last k."""
    k = pl.program_id(1)

    @pl.when(k == 0)
    def _():
        # Fold the output bias into the accumulator init (removes the epilogue add).
        acc_ref[...] = jnp.broadcast_to(
            b2_ref[...].astype(jnp.float32), acc_ref.shape)

    h = jnp.dot(x_ref[...], w1_ref[...], preferred_element_type=jnp.float32)
    h = _gelu_tanh(h + b1_ref[...].astype(jnp.float32))   # f32 GELU (EUP tanh)
    acc_ref[...] += jnp.dot(h.astype(w2_ref.dtype), w2_ref[...],
                            preferred_element_type=jnp.float32)

    @pl.when(k == pl.num_programs(1) - 1)
    def _():
        o_ref[...] = acc_ref[...].astype(o_ref.dtype)


def _ff_kernel_f32out(x_ref, w1_ref, b1_ref, w2_ref, b2_ref, o_ref):
    """f32 output: accumulate directly into the resident output tile (no f32 scratch)."""
    k = pl.program_id(1)

    @pl.when(k == 0)
    def _():
        o_ref[...] = jnp.broadcast_to(
            b2_ref[...].astype(jnp.float32), o_ref.shape)

    h = jnp.dot(x_ref[...], w1_ref[...], preferred_element_type=jnp.float32)
    h = _gelu_tanh(h + b1_ref[...].astype(jnp.float32))
    o_ref[...] += jnp.dot(h.astype(w2_ref.dtype), w2_ref[...],
                          preferred_element_type=jnp.float32)


# ---------------------------------------------------------------------------
# Tile / VMEM selection
# ---------------------------------------------------------------------------
def _pick_tile(n, target, granule):
    """Tile size (multiple of `granule`), preferring an exact divisor of n (no padding)."""
    if n <= target:
        return _round_up(n, granule)
    best = granule
    t = granule
    while t <= target:
        if n % t == 0:
            best = t
        t += granule
    if best * 4 < target:      # only tiny divisors exist -> accept padding instead
        return target
    return best


def _vmem_bytes(tm, th, E, itemsize, out_itemsize, use_scratch):
    io = 2 * tm * E * (itemsize + out_itemsize)          # double-buffered x tile + out tile
    acc = tm * E * 4 if use_scratch else 0                # f32 accumulator (if any)
    w = 2 * (E * th + th * E + th + E) * itemsize         # double-buffered W1/b1/W2/b2 chunks
    return io + acc + w


def _select_config(M, H, E, itemsize, out_itemsize, use_scratch):
    try:
        info = pltpu.get_tpu_info()
        vmem_cap = int(getattr(info, "vmem_capacity_bytes", 64 * _MiB))
    except Exception:
        vmem_cap = 64 * _MiB

    sub = max(8, 32 // itemsize)
    if vmem_cap >= 100 * _MiB:
        # v5e / v6e: 128 MiB physical VMEM -> push tm high to clear the HBM roofline.
        budget = 96 * _MiB
        tm_target, th_target = 768, 512
    else:
        # v7x: 64 MiB per TensorCore -> moderate tm, halve the hidden chunk, keep headroom.
        budget = 52 * _MiB
        tm_target, th_target = 512, 256

    th = _pick_tile(H, th_target, 128)
    tm = _pick_tile(M, tm_target, sub)

    # Shrink tiles (M tile first, then hidden chunk) until the VMEM estimate fits.
    while _vmem_bytes(tm, th, E, itemsize, out_itemsize, use_scratch) > budget and tm > sub:
        new_tm = _pick_tile(M, max(sub, tm // 2), sub)
        tm = new_tm if new_tm < tm else max(sub, _round_up(tm // 2, sub))
    while _vmem_bytes(tm, th, E, itemsize, out_itemsize, use_scratch) > budget and th > 128:
        new_th = _pick_tile(H, max(128, th // 2), 128)
        th = new_th if new_th < th else max(128, _round_up(th // 2, 128))

    vmem_limit = max(32 * _MiB, min(budget + 8 * _MiB, vmem_cap - 8 * _MiB))
    return tm, th, vmem_limit


# ---------------------------------------------------------------------------
# Wrapper
# ---------------------------------------------------------------------------
def feedforward(x, w1, b1, w2, b2, *, tm=None, th=None,
                compute_dtype=None, vmem_limit_bytes=None):
    """y = gelu_tanh(x @ w1 + b1) @ w2 + b2  (GPT FeedForward forward pass).

    x: (..., E); w1: (E, H); b1: (H,); w2: (H, E); b2: (E,) with H = 4*E.
    Weights are stored (in_features, out_features) (transpose of nn.Linear.weight).
    """
    orig_shape = x.shape
    E = orig_shape[-1]
    H = w1.shape[1]
    M = 1
    for d in orig_shape[:-1]:
        M *= d

    out_dtype = x.dtype
    if compute_dtype is not None:
        # Optional mixed precision: bf16 operands, f32 accumulation (numerics permitting).
        x = x.astype(compute_dtype)
        w1 = w1.astype(compute_dtype)
        w2 = w2.astype(compute_dtype)

    itemsize = jnp.dtype(x.dtype).itemsize
    out_itemsize = jnp.dtype(out_dtype).itemsize
    use_scratch = jnp.dtype(out_dtype) != jnp.dtype(jnp.float32)

    sub = max(8, 32 // itemsize)   # sublane granularity of the M axis for x's dtype
    auto_tm, auto_th, auto_vmem = _select_config(
        M, H, E, itemsize, out_itemsize, use_scratch)
    tm = auto_tm if tm is None else max(sub, min(_round_up(tm, sub), _round_up(M, sub)))
    th = auto_th if th is None else max(128, min(_round_up(th, 128), _round_up(H, 128)))
    if vmem_limit_bytes is None:
        vmem_limit_bytes = auto_vmem

    Mp = _round_up(M, tm)
    Hp = _round_up(H, th)

    # Padding is a fallback only (tile selection prefers exact divisors). It is exact:
    # padded x rows are sliced off and padded hidden columns give gelu(0+0)==0, which
    # contributes nothing through the matching zero rows of W2.
    x2d = x.reshape(M, E)
    if Mp != M:
        x2d = jnp.pad(x2d, ((0, Mp - M), (0, 0)))
    if Hp != H:
        w1 = jnp.pad(w1, ((0, 0), (0, Hp - H)))
        b1 = jnp.pad(b1, ((0, Hp - H),))
        w2 = jnp.pad(w2, ((0, Hp - H), (0, 0)))
    b1_2d = b1.reshape(1, Hp)
    b2_2d = b2.reshape(1, E)

    grid = (Mp // tm, Hp // th)
    num_m_tiles = grid[0]

    # Real HBM traffic: activations once, weights once per M tile (advisory only).
    w_itemsize = jnp.dtype(w1.dtype).itemsize
    cost = pl.CostEstimate(
        flops=4 * M * E * H,
        transcendentals=M * H,
        bytes_accessed=(Mp * E * (itemsize + out_itemsize)
                        + num_m_tiles * (E * Hp + Hp * E + Hp) * w_itemsize
                        + E * jnp.dtype(b2.dtype).itemsize),
    )

    in_specs = [
        pl.BlockSpec((tm, E), lambda i, k: (i, 0)),   # x tile (resident across k)
        pl.BlockSpec((E, th), lambda i, k: (0, k)),   # W1 column chunk
        pl.BlockSpec((1, th), lambda i, k: (0, k)),   # b1 chunk
        pl.BlockSpec((th, E), lambda i, k: (k, 0)),   # W2 row chunk
        pl.BlockSpec((1, E), lambda i, k: (0, 0)),    # b2 (resident)
    ]
    out_spec = pl.BlockSpec((tm, E), lambda i, k: (i, 0))

    if use_scratch:
        kernel = _ff_kernel_acc
        scratch = [pltpu.VMEM((tm, E), jnp.float32)]
    else:
        kernel = _ff_kernel_f32out
        scratch = []

    out2d = pl.pallas_call(
        kernel,
        out_shape=jax.ShapeDtypeStruct((Mp, E), out_dtype),
        grid_spec=pltpu.PrefetchScalarGridSpec(
            num_scalar_prefetch=0,
            grid=grid,
            in_specs=in_specs,
            out_specs=out_spec,
            scratch_shapes=scratch,
        ),
        compiler_params=pltpu.CompilerParams(
            dimension_semantics=("parallel", "arbitrary"),
            vmem_limit_bytes=int(vmem_limit_bytes),
        ),
        cost_estimate=cost,
    )(x2d, w1, b1_2d, w2, b2_2d)

    return out2d[:M].reshape(orig_shape)


# ---------------------------------------------------------------------------
# Params / reference / demo
# ---------------------------------------------------------------------------
def init_params(key, emb_dim, dtype=jnp.float32):
    """Deterministic init mirroring nn.Linear defaults (uniform(-1/sqrt(fan_in), ...))."""
    hidden = 4 * emb_dim
    k1, k2, k3, k4 = jax.random.split(key, 4)
    bound1 = 1.0 / float(emb_dim) ** 0.5
    bound2 = 1.0 / float(hidden) ** 0.5
    # Stored as (in, out) so the kernel does x @ W directly.
    w1 = jax.random.uniform(k1, (emb_dim, hidden), dtype, -bound1, bound1)
    b1 = jax.random.uniform(k2, (hidden,), dtype, -bound1, bound1)
    w2 = jax.random.uniform(k3, (hidden, emb_dim), dtype, -bound2, bound2)
    b2 = jax.random.uniform(k4, (emb_dim,), dtype, -bound2, bound2)
    return w1, b1, w2, b2


def _reference(x, w1, b1, w2, b2):
    xf = x.astype(jnp.float32).reshape(-1, x.shape[-1])
    h = _gelu_tanh(xf @ w1.astype(jnp.float32) + b1.astype(jnp.float32))
    y = h @ w2.astype(jnp.float32) + b2.astype(jnp.float32)
    return y.reshape(x.shape).astype(x.dtype)


if __name__ == "__main__":
    key = jax.random.PRNGKey(0)
    kx, kp, kx2, kp2 = jax.random.split(key, 4)

    # Small demo (single grid step): batch=2, seq=8, emb=32 -> hidden=128.
    batch, seq, emb = 2, 8, 32
    x = jax.random.normal(kx, (batch, seq, emb), dtype=jnp.float32)
    params = init_params(kp, emb)
    out = jax.block_until_ready(feedforward(x, *params))
    ref = _reference(x, *params)
    assert jnp.allclose(out, ref, atol=1e-5, rtol=1e-5), "mismatch vs reference (small f32)"

    # Tiled path (explicit small tiles -> grid (2, 4)): batch=2, seq=16, emb=128 (H=512).
    batch2, seq2, emb2 = 2, 16, 128
    x2 = jax.random.normal(kx2, (batch2, seq2, emb2), dtype=jnp.float32)
    params2 = init_params(kp2, emb2)
    out2 = jax.block_until_ready(feedforward(x2, *params2, tm=16, th=128))
    ref2 = _reference(x2, *params2)
    assert jnp.allclose(out2, ref2, atol=1e-4, rtol=1e-4), "mismatch vs reference (tiled f32)"

    # bf16 path (exercises the separate f32-accumulator kernel variant).
    xb = x2.astype(jnp.bfloat16)
    pb = tuple(p.astype(jnp.bfloat16) for p in params2)
    outb = jax.block_until_ready(feedforward(xb, *pb, tm=16, th=128))
    refb = _reference(xb, *pb)
    assert jnp.allclose(outb.astype(jnp.float32), refb.astype(jnp.float32),
                        atol=5e-2, rtol=5e-2), "mismatch vs reference (tiled bf16)"

    print("KERNEL_OK")
</pallas_src>

<mosaic_0001>
module attributes {stable_mosaic.version = 11 : i64} {
  func.func @_ff_kernel_f32out(%arg0: i32, %arg1: i32, %arg2: memref<16x32xf32, #tpu.memory_space<vmem>>, %arg3: memref<32x128xf32, #tpu.memory_space<vmem>>, %arg4: memref<1x128xf32, #tpu.memory_space<vmem>>, %arg5: memref<128x32xf32, #tpu.memory_space<vmem>>, %arg6: memref<1x32xf32, #tpu.memory_space<vmem>>, %arg7: memref<16x32xf32, #tpu.memory_space<vmem>>) attributes {dimension_semantics = [#tpu.dimension_semantics<parallel>, #tpu.dimension_semantics<arbitrary>], iteration_bounds = array<i64: 1, 1>, scalar_prefetch = 0 : i64, scratch_operands = 0 : i64, tpu.core_type = #tpu.core_type<tc>, window_params = [{transform_indices = @transform_0, window_bounds = array<i64: 16, 32>}, {transform_indices = @transform_1, window_bounds = array<i64: 32, 128>}, {transform_indices = @transform_2, window_bounds = array<i64: 1, 128>}, {transform_indices = @transform_3, window_bounds = array<i64: 128, 32>}, {pipeline_mode = #tpu.pipeline_mode<synchronous>, transform_indices = @transform_4, window_bounds = array<i64: 1, 32>}, {transform_indices = @transform_5, window_bounds = array<i64: 16, 32>}]} {
    %c0_i32 = arith.constant 0 : i32
    %0 = arith.cmpi eq, %arg1, %c0_i32 : i32
    %1 = arith.extui %0 : i1 to i32
    %c0_i32_0 = arith.constant 0 : i32
    %2 = arith.cmpi ne, %1, %c0_i32_0 : i32
    scf.if %2 {
      %c0_17 = arith.constant 0 : index
      %c0_18 = arith.constant 0 : index
      %28 = vector.load %arg6[%c0_17, %c0_18] : memref<1x32xf32, #tpu.memory_space<vmem>>, vector<1x32xf32>
      %29 = vector.shape_cast %28 : vector<1x32xf32> to vector<1x32xf32>
      %30 = vector.broadcast %29 : vector<1x32xf32> to vector<16x32xf32>
      %c0_19 = arith.constant 0 : index
      %c0_20 = arith.constant 0 : index
      %31 = vector.load %arg7[%c0_19, %c0_20] : memref<16x32xf32, #tpu.memory_space<vmem>>, vector<16x32xf32>
      tpu.vector_store %arg7[%c0_19, %c0_20], %30 {strides = array<i32>} : memref<16x32xf32, #tpu.memory_space<vmem>>, vector<16x32xf32>,
    } else {
    }
    %c0 = arith.constant 0 : index
    %c0_1 = arith.constant 0 : index
    %3 = vector.load %arg2[%c0, %c0_1] : memref<16x32xf32, #tpu.memory_space<vmem>>, vector<16x32xf32>
    %c0_2 = arith.constant 0 : index
    %c0_3 = arith.constant 0 : index
    %4 = vector.load %arg3[%c0_2, %c0_3] : memref<32x128xf32, #tpu.memory_space<vmem>>, vector<32x128xf32>
    %cst = arith.constant dense<0.000000e+00> : vector<16x128xf32>
    %5 = tpu.matmul %3, %4, %cst {dimension_numbers = #tpu.dot_dimension_numbers<[1], [0], [0], [1], [0, 0, 1, 1], [], []>} : vector<16x32xf32>, vector<32x128xf32>, vector<16x128xf32> -> vector<16x128xf32>
    %c0_4 = arith.constant 0 : index
    %c0_5 = arith.constant 0 : index
    %6 = vector.load %arg4[%c0_4, %c0_5] : memref<1x128xf32, #tpu.memory_space<vmem>>, vector<1x128xf32>
    %7 = vector.broadcast %6 : vector<1x128xf32> to vector<16x128xf32>
    %8 = arith.addf %5, %7 : vector<16x128xf32>
    %cst_6 = arith.constant 0.636619746 : f32
    %9 = math.sqrt %cst_6 : f32
    %cst_7 = arith.constant 5.000000e-01 : f32
    %10 = vector.broadcast %cst_7 : f32 to vector<16x128xf32>
    %11 = arith.mulf %10, %8 : vector<16x128xf32>
    %cst_8 = arith.constant 4.471500e-02 : f32
    %12 = vector.broadcast %cst_8 : f32 to vector<16x128xf32>
    %13 = arith.mulf %12, %8 : vector<16x128xf32>
    %14 = arith.mulf %13, %8 : vector<16x128xf32>
    %15 = arith.mulf %14, %8 : vector<16x128xf32>
    %16 = arith.addf %8, %15 : vector<16x128xf32>
    %17 = vector.broadcast %9 : f32 to vector<16x128xf32>
    %18 = arith.mulf %17, %16 : vector<16x128xf32>
    %19 = math.tanh %18 : vector<16x128xf32>
    %cst_9 = arith.constant 1.000000e+00 : f32
    %20 = vector.broadcast %cst_9 : f32 to vector<16x128xf32>
    %21 = arith.addf %20, %19 : vector<16x128xf32>
    %22 = arith.mulf %11, %21 : vector<16x128xf32>
    %c0_10 = arith.constant 0 : index
    %c0_11 = arith.constant 0 : index
    %23 = vector.load %arg7[%c0_10, %c0_11] : memref<16x32xf32, #tpu.memory_space<vmem>>, vector<16x32xf32>
    %c0_12 = arith.constant 0 : index
    %c0_13 = arith.constant 0 : index
    %24 = vector.load %arg5[%c0_12, %c0_13] : memref<128x32xf32, #tpu.memory_space<vmem>>, vector<128x32xf32>
    %cst_14 = arith.constant dense<0.000000e+00> : vector<16x32xf32>
    %25 = tpu.matmul %22, %24, %cst_14 {dimension_numbers = #tpu.dot_dimension_numbers<[1], [0], [0], [1], [0, 0, 1, 1], [], []>} : vector<16x128xf32>, vector<128x32xf32>, vector<16x32xf32> -> vector<16x32xf32>
    %26 = arith.addf %23, %25 : vector<16x32xf32>
    %c0_15 = arith.constant 0 : index
    %c0_16 = arith.constant 0 : index
    %27 = vector.load %arg7[%c0_15, %c0_16] : memref<16x32xf32, #tpu.memory_space<vmem>>, vector<16x32xf32>
    tpu.vector_store %arg7[%c0_15, %c0_16], %26 {strides = array<i32>} : memref<16x32xf32, #tpu.memory_space<vmem>>, vector<16x32xf32>,
    return
  }
  func.func @transform_0(%arg0: i32, %arg1: i32) -> (i32, i32) {
    %c0_i32 = arith.constant 0 : i32
    %c0_i32_0 = arith.constant 0 : i32
    return %arg0, %c0_i32 : i32, i32
  }
  func.func @transform_1(%arg0: i32, %arg1: i32) -> (i32, i32) {
    %c0_i32 = arith.constant 0 : i32
    %c0_i32_0 = arith.constant 0 : i32
    return %c0_i32, %arg1 : i32, i32
  }
  func.func @transform_2(%arg0: i32, %arg1: i32) -> (i32, i32) {
    %c0_i32 = arith.constant 0 : i32
    %c0_i32_0 = arith.constant 0 : i32
    return %c0_i32, %arg1 : i32, i32
  }
  func.func @transform_3(%arg0: i32, %arg1: i32) -> (i32, i32) {
    %c0_i32 = arith.constant 0 : i32
    %c0_i32_0 = arith.constant 0 : i32
    return %arg1, %c0_i32 : i32, i32
  }
  func.func @transform_4(%arg0: i32, %arg1: i32) -> (i32, i32) {
    %c0_i32 = arith.constant 0 : i32
    %c0_i32_0 = arith.constant 0 : i32
    %c0_i32_1 = arith.constant 0 : i32
    return %c0_i32, %c0_i32_0 : i32, i32
  }
  func.func @transform_5(%arg0: i32, %arg1: i32) -> (i32, i32) {
    %c0_i32 = arith.constant 0 : i32
    %c0_i32_0 = arith.constant 0 : i32
    return %arg0, %c0_i32 : i32, i32
  }
}

</mosaic_0001>

<llo_original>
// kernel: tpu_custom_call.1
$region0: #{tpu_custom_call.1}
  #allocation0 [shape = 'u32[]', space=smem, size = 0x4, offset = 0x4, fixed_abs, tag = 'smem constant byte address 0x4 - core index']
  #allocation1 [shape = 'u32[144,128]{1,0:T(1,128)}', space=vmem, size = 0x12000, scoped, tag = 'internal scratch']
  %s0 = inlined_call_operand.vmem [shape: f32[16,32], index: 0, kind: input, shape index: {}]
  %s1 = inlined_call_operand.vmem [shape: f32[32,128], index: 1, kind: input, shape index: {}]
  %s2 = inlined_call_operand.vmem [shape: f32[1,128], index: 2, kind: input, shape index: {}]
  %s3 = inlined_call_operand.vmem [shape: f32[128,32], index: 3, kind: input, shape index: {}]
  %s4 = inlined_call_operand.vmem [shape: f32[1,32], index: 4, kind: input, shape index: {}]
  %s5 = inlined_call_operand.hbm [shape: f32[16,32], index: 5, kind: output, shape index: {}]
  %s6 = sld [smem:[#allocation0]]
  $region34: #{tpu_custom_call.1} parent=0
    _
  %s8 = ssub.s32 1, %s6
  %s9 = scalar_select 0, %s8, %s6
  $region1: #{tpu_custom_call.1} parent=0
    #allocation2 [shape = 'u8[8192]{0}', space=vmem, size = 0x2000, scoped, tag = 'output window, operand 0, single buffered']
    #allocation3 [shape = 's32[1]{0}', space=sflag, size = 0x4, scoped, tag = 'scoped memory for tpu_custom_call.1']
    %10 = vsyncpa [#allocation3], 0
    // Predicated region
    $region2: #{tpu_custom_call.1} parent=1 // pred_check
      _
    $region3: #{tpu_custom_call.1} parent=1 // pred_check_branch
      %12 = sbr.rel (0) target = $region5
    $region4: #{tpu_custom_call.1} parent=1 // pred_region
      _
    $region5: #{tpu_custom_call.1} parent=1 // pred_fallthru
      _
    // Predicated region
    $region6: #{tpu_custom_call.1} parent=1 // pred_check
      _
    $region7: #{tpu_custom_call.1} parent=1 // pred_check_branch
      %14 = sbr.rel (0) target = $region9
    $region8: #{tpu_custom_call.1} parent=1 // pred_region
      _
    $region9: #{tpu_custom_call.1} parent=1 // pred_fallthru
      _
    // Predicated region
    $region10: #{tpu_custom_call.1} parent=1 // pred_check
      _
    $region11: #{tpu_custom_call.1} parent=1 // pred_check_branch
      %16 = sbr.rel (0) target = $region13
    $region12: #{tpu_custom_call.1} parent=1 // pred_region
      _
    $region13: #{tpu_custom_call.1} parent=1 // pred_fallthru
      _
    // Predicated region
    $region14: #{tpu_custom_call.1} parent=1 // pred_check
      _
    $region15: #{tpu_custom_call.1} parent=1 // pred_check_branch
      %18 = sbr.rel (0) target = $region17
    $region16: #{tpu_custom_call.1} parent=1 // pred_region
      _
    $region17: #{tpu_custom_call.1} parent=1 // pred_fallthru
      _
    // Predicated region
    $region18: #{tpu_custom_call.1} parent=1 // pred_check
      _
    $region19: #{tpu_custom_call.1} parent=1 // pred_check_branch
      %20 = sbr.rel (0) target = $region21
    $region20: #{tpu_custom_call.1} parent=1 // pred_region
      _
    $region21: #{tpu_custom_call.1} parent=1 // pred_fallthru
      _
    %p21 = scmp.eq.s32.totalorder 0, 0
    // Predicated region
    $region22: #{tpu_custom_call.1} parent=1 // pred_check
      %p22 = pneg %p21
    $region23: #{tpu_custom_call.1} parent=1 // pred_check_branch
      %24 = sbr.rel (%p22) target = $region25
    $region24: #{tpu_custom_call.1} parent=1 // pred_region
      %v25 = vld [vmem:[%s4] sm:$0x1]
      %v27 = vlaneseq
      %v28 = vshrl.u32 %v27, 7
      %v29 = vsub.s32 0, %v28
      %v30 = vrot.slane %v25, %v29
      %vm32 = vcmask 261120
      %33 = vst.msk [vmem:[#allocation2] sm:$0xff] %vm32, %v30
      %34 = vst.msk [vmem:[#allocation2 + $0x8] sm:$0xff] %vm32, %v30
    $region25: #{tpu_custom_call.1} parent=1 // pred_fallthru
      _
    %v35 = vld [vmem:[%s0] sm:$0xff]
    %v36 = vld [vmem:[%s0 + $0x8] sm:$0xff]
    %v37 = vld [vmem:[%s1] sm:$0xff]
    %v38 = vld [vmem:[%s1 + $0x8] sm:$0xff]
    %v39 = vld [vmem:[%s1 + $0x10] sm:$0xff]
    %v40 = vld [vmem:[%s1 + $0x18] sm:$0xff]
    %v41 = vld [vmem:[%s2] sm:$0x1]
    %v43 = vlaneseq
    %v44 = vshrl.u32 %v43, 7
    %v45 = vsub.s32 0, %v44
    %v46 = vrot.slane %v41, %v45
    %vm48 = vcmask 261120
    %v50 = vsel %vm48, %v35, 0
    %v53 = vsel %vm48, %v36, 0
    %55 = vmatprep.subr.mxu0 0.0
    %56 = vmatpush1.msra.mxu0 0.0
    %57 = vmatprep.subr.mxu0 0.0
    %58 = vmatpush1.msra.mxu0 0.0
    %59 = vmatprep.subr.mxu0 0.0
    %60 = vmatpush1.msra.mxu0 0.0
    %61 = vmatprep.subr.mxu0 0.0
    %62 = vmatpush1.msra.mxu0 0.0
    %63 = vmatprep.subr.mxu0 0.0
    %64 = vmatpush1.msra.mxu0 0.0
    %65 = vmatprep.subr.mxu0 0.0
    %66 = vmatpush1.msra.mxu0 0.0
    %67 = vmatprep.subr.mxu0 0.0
    %68 = vmatpush1.msra.mxu0 0.0
    %69 = vmatprep.subr.mxu0 0.0
    %70 = vmatpush1.msra.mxu0 0.0
    %71 = vmatprep.subr.mxu0 0.0
    %72 = vmatpush1.msra.mxu0 0.0
    %73 = vmatprep.subr.mxu0 0.0
    %74 = vmatpush1.msra.mxu0 0.0
    %75 = vmatprep.subr.mxu0 0.0
    %76 = vmatpush1.msra.mxu0 0.0
    %77 = vmatprep.subr.mxu0 0.0
    %78 = vmatpush1.msra.mxu0 0.0
    %79 = vmatprep.subr.mxu0 0.0
    %80 = vmatpush1.msra.mxu0 %v40
    %81 = vmatprep.subr.mxu0 0.0
    %82 = vmatpush1.msra.mxu0 %v39
    %83 = vmatprep.subr.mxu0 0.0
    %84 = vmatpush1.msra.mxu0 %v38
    %85 = vmatprep.subr.mxu0 0.0
    %86 = vmatpush1.msra.mxu0 %v37
    %87 = vmatprep.subr.mxu0 0.0
    %88 = vmatpush2.msra.mxu0 0.0
    %89 = vmatprep.subr.mxu0 0.0
    %90 = vmatpush2.msra.mxu0 0.0
    %91 = vmatprep.subr.mxu0 0.0
    %92 = vmatpush2.msra.mxu0 0.0
    %93 = vmatprep.subr.mxu0 0.0
    %94 = vmatpush2.msra.mxu0 0.0
    %95 = vmatprep.subr.mxu0 0.0
    %96 = vmatpush2.msra.mxu0 0.0
    %97 = vmatprep.subr.mxu0 0.0
    %98 = vmatpush2.msra.mxu0 0.0
    %99 = vmatprep.subr.mxu0 0.0
    %100 = vmatpush2.msra.mxu0 0.0
    %101 = vmatprep.subr.mxu0 0.0
    %102 = vmatpush2.msra.mxu0 0.0
    %103 = vmatprep.subr.mxu0 0.0
    %104 = vmatpush2.msra.mxu0 0.0
    %105 = vmatprep.subr.mxu0 0.0
    %106 = vmatpush2.msra.mxu0 0.0
    %107 = vmatprep.subr.mxu0 0.0
    %108 = vmatpush2.msra.mxu0 0.0
    %109 = vmatprep.subr.mxu0 0.0
    %110 = vmatpush2.msra.mxu0 0.0
    %111 = vmatprep.subr.mxu0 0.0
    %112 = vmatpush2.msra.mxu0 0.0
    %113 = vmatprep.subr.mxu0 0.0
    %114 = vmatpush2.msra.mxu0 0.0
    %115 = vmatprep.subr.mxu0 0.0
    %116 = vmatpush2.msra.mxu0 0.0
    %117 = vmatprep.subr.mxu0 0.0
    %118 = vmatpush2.msra.mxu0 0.0
    %119 = vmatprep.mubr.f32.mxu0 0.0
    %120 = vmatmul.mubr.f32.gmra.mxu0 %v50
    %v121 = vpop.f32.mrf.mxu0
    %v122 = vadd.f32 %v46, %v121
    %v123 = vpop.f32.mrf.mxu0
    %124 = vmatprep.mubr.f32.mxu0 0.0
    %125 = vmatmul.mubr.f32.gmra.mxu0 %v53
    %v126 = vpop.f32.mrf.mxu0
    %v127 = vadd.f32 %v46, %v126
    %v128 = vpop.f32.mrf.mxu0
    %129 = vdwg.mxu0
    %v130 = vmul.f32 %v122, 0.5
    %v131 = vmul.f32 %v127, 0.5
    %v132 = vmul.f32 %v122, 0.044715
    %v133 = vmul.f32 %v127, 0.044715
    %v134 = vmul.f32 %v132, %v122
    %v135 = vmul.f32 %v133, %v127
    %v136 = vmul.f32 %v134, %v122
    %v137 = vmul.f32 %v135, %v127
    %v138 = vadd.f32 %v122, %v136
    %v139 = vadd.f32 %v127, %v137
    %v140 = vmul.f32 %v138, 0.7978845
    %v141 = vmul.f32 %v139, 0.7978845
    %v142 = vtanh.pop %v140
    %v143 = vtanh.pop %v141
    %v144 = vadd.f32 %v142, 1.0
    %v145 = vadd.f32 %v143, 1.0
    %v146 = vmul.f32 %v130, %v144
    %v147 = vmul.f32 %v131, %v145
    %v148 = vld [vmem:[#allocation2] sm:$0xff]
    %v149 = vld [vmem:[#allocation2 + $0x8] sm:$0xff]
    %v150 = vld [vmem:[%s3] sm:$0xff]
    %v151 = vld [vmem:[%s3 + $0x8] sm:$0xff]
    %v152 = vld [vmem:[%s3 + $0x10] sm:$0xff]
    %v153 = vld [vmem:[%s3 + $0x18] sm:$0xff]
    %v154 = vld [vmem:[%s3 + $0x20] sm:$0xff]
    %v155 = vld [vmem:[%s3 + $0x28] sm:$0xff]
    %v156 = vld [vmem:[%s3 + $0x30] sm:$0xff]
    %v157 = vld [vmem:[%s3 + $0x38] sm:$0xff]
    %v158 = vld [vmem:[%s3 + $0x40] sm:$0xff]
    %v159 = vld [vmem:[%s3 + $0x48] sm:$0xff]
    %v160 = vld [vmem:[%s3 + $0x50] sm:$0xff]
    %v161 = vld [vmem:[%s3 + $0x58] sm:$0xff]
    %v162 = vld [vmem:[%s3 + $0x60] sm:$0xff]
    %v163 = vld [vmem:[%s3 + $0x68] sm:$0xff]
    %v164 = vld [vmem:[%s3 + $0x70] sm:$0xff]
    %v165 = vld [vmem:[%s3 + $0x78] sm:$0xff]
    %166 = vmatprep.subr.mxu0 0.0
    %167 = vmatpush1.msra.mxu0 %v165
    %168 = vmatprep.subr.mxu0 0.0
    %169 = vmatpush1.msra.mxu0 %v164
    %170 = vmatprep.subr.mxu0 0.0
    %171 = vmatpush1.msra.mxu0 %v163
    %172 = vmatprep.subr.mxu0 0.0
    %173 = vmatpush1.msra.mxu0 %v162
    %174 = vmatprep.subr.mxu0 0.0
    %175 = vmatpush1.msra.mxu0 %v161
    %176 = vmatprep.subr.mxu0 0.0
    %177 = vmatpush1.msra.mxu0 %v160
    %178 = vmatprep.subr.mxu0 0.0
    %179 = vmatpush1.msra.mxu0 %v159
    %180 = vmatprep.subr.mxu0 0.0
    %181 = vmatpush1.msra.mxu0 %v158
    %182 = vmatprep.subr.mxu0 0.0
    %183 = vmatpush1.msra.mxu0 %v157
    %184 = vmatprep.subr.mxu0 0.0
    %185 = vmatpush1.msra.mxu0 %v156
    %186 = vmatprep.subr.mxu0 0.0
    %187 = vmatpush1.msra.mxu0 %v155
    %188 = vmatprep.subr.mxu0 0.0
    %189 = vmatpush1.msra.mxu0 %v154
    %190 = vmatprep.subr.mxu0 0.0
    %191 = vmatpush1.msra.mxu0 %v153
    %192 = vmatprep.subr.mxu0 0.0
    %193 = vmatpush1.msra.mxu0 %v152
    %194 = vmatprep.subr.mxu0 0.0
    %195 = vmatpush1.msra.mxu0 %v151
    %196 = vmatprep.subr.mxu0 0.0
    %197 = vmatpush1.msra.mxu0 %v150
    %198 = vmatprep.subr.mxu0 0.0
    %199 = vmatpush2.msra.mxu0 0.0
    %200 = vmatprep.subr.mxu0 0.0
    %201 = vmatpush2.msra.mxu0 0.0
    %202 = vmatprep.subr.mxu0 0.0
    %203 = vmatpush2.msra.mxu0 0.0
    %204 = vmatprep.subr.mxu0 0.0
    %205 = vmatpush2.msra.mxu0 0.0
    %206 = vmatprep.subr.mxu0 0.0
    %207 = vmatpush2.msra.mxu0 0.0
    %208 = vmatprep.subr.mxu0 0.0
    %209 = vmatpush2.msra.mxu0 0.0
    %210 = vmatprep.subr.mxu0 0.0
    %211 = vmatpush2.msra.mxu0 0.0
    %212 = vmatprep.subr.mxu0 0.0
    %213 = vmatpush2.msra.mxu0 0.0
    %214 = vmatprep.subr.mxu0 0.0
    %215 = vmatpush2.msra.mxu0 0.0
    %216 = vmatprep.subr.mxu0 0.0
    %217 = vmatpush2.msra.mxu0 0.0
    %218 = vmatprep.subr.mxu0 0.0
    %219 = vmatpush2.msra.mxu0 0.0
    %220 = vmatprep.subr.mxu0 0.0
    %221 = vmatpush2.msra.mxu0 0.0
    %222 = vmatprep.subr.mxu0 0.0
    %223 = vmatpush2.msra.mxu0 0.0
    %224 = vmatprep.subr.mxu0 0.0
    %225 = vmatpush2.msra.mxu0 0.0
    %226 = vmatprep.subr.mxu0 0.0
    %227 = vmatpush2.msra.mxu0 0.0
    %228 = vmatprep.subr.mxu0 0.0
    %229 = vmatpush2.msra.mxu0 0.0
    %230 = vmatprep.mubr.f32.mxu0 0.0
    %231 = vmatmul.mubr.f32.gmra.mxu0 %v146
    %v232 = vpop.f32.mrf.mxu0
    %v233 = vadd.f32 0.0, %v232
    %v234 = vpop.f32.mrf.mxu0
    %235 = vmatprep.mubr.f32.mxu0 0.0
    %236 = vmatmul.mubr.f32.gmra.mxu0 %v147
    %v237 = vpop.f32.mrf.mxu0
    %v238 = vadd.f32 0.0, %v237
    %v239 = vpop.f32.mrf.mxu0
    %240 = vdwg.mxu0
    %v241 = vadd.f32 %v148, %v233
    %v242 = vadd.f32 %v149, %v238
    %243 = vst.msk [vmem:[#allocation2] sm:$0xff] %vm48, %v241
    %244 = vst.msk [vmem:[#allocation2 + $0x8] sm:$0xff] %vm48, %v242
    // Predicated region
    $region26: #{tpu_custom_call.1} parent=1 // pred_check
      _
    $region27: #{tpu_custom_call.1} parent=1 // pred_check_branch
      %246 = sbr.rel (0) target = $region29
    $region28: #{tpu_custom_call.1} parent=1 // pred_region
      %s248 = ssub.s32 256, 256
      %249 = vsyncadd [#allocation3], %s248
      %s250 = sshll.u32 [#allocation2], 4
      %s251 = int_to_ptr.vmem [resolvable:$true] %s250
      %256 = dma.vmem_to_hbm [thread:$0]  %s251, 256, %s5, [#allocation3], 128, 128, 8
    $region29: #{tpu_custom_call.1} parent=1 // pred_fallthru
      _
    // Predicated region
    $region30: #{tpu_custom_call.1} parent=1 // pred_check
      _
    $region31: #{tpu_custom_call.1} parent=1 // pred_check_branch
      %258 = sbr.rel (0) target = $region33
    $region32: #{tpu_custom_call.1} parent=1 // pred_region
      %259 = dma.done [#allocation3], 256
    $region33: #{tpu_custom_call.1} parent=1 // pred_fallthru
      _
    %260 = vsyncpa [#allocation3], 1

</llo_original>
